<compile_context>
chip_gen: v6e
topology: v6e:2x2x1
jax: 0.10.0
libtpu: 0.0.40
codegen_flags: <defaults>
</compile_context>

<pallas_src>
import jax
import jax.numpy as jnp
from jax.experimental import pallas as pl
from jax.experimental.pallas import tpu as pltpu

IN_DIM = 5 * 5     # 25
HID = 100
OUT_DIM = 44

P_IN = 32          # padded input features
P_HID = 128        # padded hidden width (lane multiple)
P_OUT = 128        # padded output width (lane-dense stores)

TB_MAX = 2048      # max batch tile (rows) per grid step


def _mlp_kernel(x_ref, w1_ref, b1_ref, w2_ref, b2_ref, w3_ref, b3_ref, o_ref):
    x = x_ref[...]                                                    # (TB, 32) bf16
    # Linear(25 -> 100) + ReLU   (padded to 32 -> 128)
    h1 = jnp.dot(x, w1_ref[...], preferred_element_type=jnp.float32) + b1_ref[...]
    h1 = jnp.maximum(h1, 0.0).astype(jnp.bfloat16)
    # Linear(100 -> 100) + ReLU  (padded to 128 -> 128)
    h2 = jnp.dot(h1, w2_ref[...], preferred_element_type=jnp.float32) + b2_ref[...]
    h2 = jnp.maximum(h2, 0.0).astype(jnp.bfloat16)
    # Dropout(0.5) is identity at inference time (module.eval()).
    # TODO(synk): training-mode dropout (prng mask + 1/(1-p) scaling) not implemented.
    # Linear(100 -> 44)          (padded to 128 -> 128; extra cols are exactly 0)
    o_ref[...] = (jnp.dot(h2, w3_ref[...], preferred_element_type=jnp.float32)
                  + b3_ref[...]).astype(o_ref.dtype)


def _pad2(a, rows, cols, dtype):
    r, c = a.shape
    return jnp.pad(a, ((0, rows - r), (0, cols - c))).astype(dtype)


def prepare_padded(params):
    """Zero-pad weights/biases to lane-aligned shapes; weights bf16, biases f32."""
    return dict(
        w1=_pad2(params["w1"], P_IN, P_HID, jnp.bfloat16),
        b1=_pad2(params["b1"], 1, P_HID, jnp.float32),
        w2=_pad2(params["w2"], P_HID, P_HID, jnp.bfloat16),
        b2=_pad2(params["b2"], 1, P_HID, jnp.float32),
        w3=_pad2(params["w3"], P_HID, P_OUT, jnp.bfloat16),
        b3=_pad2(params["b3"], 1, P_OUT, jnp.float32),
    )


@jax.jit
def quixo_net_forward(x, params):
    """x: [B, 25] float32. params: dict w1,b1,w2,b2,w3,b3 with weights stored [in, out]."""
    B = x.shape[0]
    pp = prepare_padded(params)

    # Batch tiling: pad B to a multiple of the tile so every block is full.
    B8 = ((B + 7) // 8) * 8
    TB = min(TB_MAX, B8)
    B_pad = ((B8 + TB - 1) // TB) * TB
    grid = (B_pad // TB,)

    x_p = jnp.pad(x, ((0, B_pad - B), (0, P_IN - IN_DIM))).astype(jnp.bfloat16)

    flops = 2 * B_pad * (P_IN * P_HID + P_HID * P_HID + P_HID * P_OUT)
    bytes_accessed = (
        x_p.size * 2                              # streamed bf16 input
        + B_pad * P_OUT * 4                       # streamed f32 output
        + sum(int(v.size) * v.dtype.itemsize for v in pp.values())
    )

    const = lambda i: (0, 0)   # weights/biases resident across the batch grid
    tiled = lambda i: (i, 0)   # x / out tiles walk the batch dimension

    out_p = pl.pallas_call(
        _mlp_kernel,
        out_shape=jax.ShapeDtypeStruct((B_pad, P_OUT), jnp.float32),
        grid=grid,
        in_specs=[
            pl.BlockSpec((TB, P_IN), tiled),
            pl.BlockSpec((P_IN, P_HID), const),
            pl.BlockSpec((1, P_HID), const),
            pl.BlockSpec((P_HID, P_HID), const),
            pl.BlockSpec((1, P_HID), const),
            pl.BlockSpec((P_HID, P_OUT), const),
            pl.BlockSpec((1, P_OUT), const),
        ],
        out_specs=pl.BlockSpec((TB, P_OUT), tiled),
        compiler_params=pltpu.CompilerParams(
            dimension_semantics=("parallel",)),
        cost_estimate=pl.CostEstimate(
            flops=flops, transcendentals=0, bytes_accessed=bytes_accessed),
    )(x_p, pp["w1"], pp["b1"], pp["w2"], pp["b2"], pp["w3"], pp["b3"])

    return out_p[:B, :OUT_DIM]


def init_params(key):
    """Deterministic init mirroring the module: xavier_uniform_ weights, PyTorch-default biases."""
    def xavier(key, fan_in, fan_out):
        bound = (6.0 / (fan_in + fan_out)) ** 0.5
        # stored as [in, out] (transpose of PyTorch's [out, in]); same distribution.
        return jax.random.uniform(key, (fan_in, fan_out), jnp.float32, -bound, bound)

    def bias(key, fan_in, fan_out):
        bound = 1.0 / (fan_in ** 0.5)   # PyTorch nn.Linear default bias init
        return jax.random.uniform(key, (1, fan_out), jnp.float32, -bound, bound)

    k = jax.random.split(key, 6)
    return {
        "w1": xavier(k[0], IN_DIM, HID),  "b1": bias(k[1], IN_DIM, HID),
        "w2": xavier(k[2], HID, HID),     "b2": bias(k[3], HID, HID),
        "w3": xavier(k[4], HID, OUT_DIM), "b3": bias(k[5], HID, OUT_DIM),
    }


def _reference_forward_bf16(x, params):
    """Pure-JAX reference mirroring the kernel's bf16-input / f32-accumulate math."""
    pp = prepare_padded(params)
    f32 = jnp.float32
    xb = jnp.pad(x, ((0, 0), (0, P_IN - IN_DIM))).astype(jnp.bfloat16).astype(f32)
    h1 = jnp.maximum(xb @ pp["w1"].astype(f32) + pp["b1"], 0.0)
    h1 = h1.astype(jnp.bfloat16).astype(f32)
    h2 = jnp.maximum(h1 @ pp["w2"].astype(f32) + pp["b2"], 0.0)
    h2 = h2.astype(jnp.bfloat16).astype(f32)
    return (h2 @ pp["w3"].astype(f32) + pp["b3"])[:, :OUT_DIM]


def _reference_forward_f32(x, p):
    """Original full-f32 module semantics (eval-mode dropout = identity)."""
    h1 = jnp.maximum(x @ p["w1"] + p["b1"], 0.0)
    h2 = jnp.maximum(h1 @ p["w2"] + p["b2"], 0.0)
    return h2 @ p["w3"] + p["b3"]


if __name__ == "__main__":
    key = jax.random.PRNGKey(0)
    kx, kp = jax.random.split(key)

    B = 8
    x = jax.random.normal(kx, (B, IN_DIM), jnp.float32)   # flattened 5x5 board
    params = init_params(kp)

    out = quixo_net_forward(x, params)
    out = jax.block_until_ready(out)
    assert out.shape == (B, OUT_DIM), out.shape

    # Tight check vs a reference that uses the same bf16-input / f32-accumulate math.
    ref_bf16 = _reference_forward_bf16(x, params)
    assert jnp.allclose(out, ref_bf16, atol=1e-2, rtol=1e-2), "mismatch vs bf16-matched reference"

    # Looser check vs the original f32 module semantics (bf16 input rounding only).
    ref_f32 = _reference_forward_f32(x, params)
    assert jnp.allclose(out, ref_f32, atol=5e-2, rtol=5e-2), "mismatch vs f32 semantics reference"

    print("KERNEL_OK")
</pallas_src>

<mosaic_0001>
module attributes {stable_mosaic.version = 11 : i64} {
  func.func @_mlp_kernel(%arg0: i32, %arg1: memref<8x32xbf16, #tpu.memory_space<vmem>>, %arg2: memref<32x128xbf16, #tpu.memory_space<vmem>>, %arg3: memref<1x128xf32, #tpu.memory_space<vmem>>, %arg4: memref<128x128xbf16, #tpu.memory_space<vmem>>, %arg5: memref<1x128xf32, #tpu.memory_space<vmem>>, %arg6: memref<128x128xbf16, #tpu.memory_space<vmem>>, %arg7: memref<1x128xf32, #tpu.memory_space<vmem>>, %arg8: memref<8x128xf32, #tpu.memory_space<vmem>>) attributes {dimension_semantics = [#tpu.dimension_semantics<parallel>], iteration_bounds = array<i64: 1>, scalar_prefetch = 0 : i64, scratch_operands = 0 : i64, tpu.core_type = #tpu.core_type<tc>, window_params = [{transform_indices = @transform_0, window_bounds = array<i64: 8, 32>}, {pipeline_mode = #tpu.pipeline_mode<synchronous>, transform_indices = @transform_1, window_bounds = array<i64: 32, 128>}, {pipeline_mode = #tpu.pipeline_mode<synchronous>, transform_indices = @transform_2, window_bounds = array<i64: 1, 128>}, {pipeline_mode = #tpu.pipeline_mode<synchronous>, transform_indices = @transform_3, window_bounds = array<i64: 128, 128>}, {pipeline_mode = #tpu.pipeline_mode<synchronous>, transform_indices = @transform_4, window_bounds = array<i64: 1, 128>}, {pipeline_mode = #tpu.pipeline_mode<synchronous>, transform_indices = @transform_5, window_bounds = array<i64: 128, 128>}, {pipeline_mode = #tpu.pipeline_mode<synchronous>, transform_indices = @transform_6, window_bounds = array<i64: 1, 128>}, {transform_indices = @transform_7, window_bounds = array<i64: 8, 128>}]} {
    %c0 = arith.constant 0 : index
    %c0_0 = arith.constant 0 : index
    %0 = vector.load %arg1[%c0, %c0_0] : memref<8x32xbf16, #tpu.memory_space<vmem>>, vector<8x32xbf16>
    %c0_1 = arith.constant 0 : index
    %c0_2 = arith.constant 0 : index
    %1 = vector.load %arg2[%c0_1, %c0_2] : memref<32x128xbf16, #tpu.memory_space<vmem>>, vector<32x128xbf16>
    %cst = arith.constant dense<0.000000e+00> : vector<8x128xf32>
    %2 = tpu.matmul %0, %1, %cst {dimension_numbers = #tpu.dot_dimension_numbers<[1], [0], [0], [1], [0, 0, 1, 1], [], []>} : vector<8x32xbf16>, vector<32x128xbf16>, vector<8x128xf32> -> vector<8x128xf32>
    %c0_3 = arith.constant 0 : index
    %c0_4 = arith.constant 0 : index
    %3 = vector.load %arg3[%c0_3, %c0_4] : memref<1x128xf32, #tpu.memory_space<vmem>>, vector<1x128xf32>
    %4 = vector.broadcast %3 : vector<1x128xf32> to vector<8x128xf32>
    %5 = arith.addf %2, %4 : vector<8x128xf32>
    %cst_5 = arith.constant 0.000000e+00 : f32
    %6 = vector.broadcast %cst_5 : f32 to vector<8x128xf32>
    %7 = arith.maximumf %5, %6 : vector<8x128xf32>
    %8 = arith.truncf %7 : vector<8x128xf32> to vector<8x128xbf16>
    %c0_6 = arith.constant 0 : index
    %c0_7 = arith.constant 0 : index
    %9 = vector.load %arg4[%c0_6, %c0_7] : memref<128x128xbf16, #tpu.memory_space<vmem>>, vector<128x128xbf16>
    %cst_8 = arith.constant dense<0.000000e+00> : vector<8x128xf32>
    %10 = tpu.matmul %8, %9, %cst_8 {dimension_numbers = #tpu.dot_dimension_numbers<[1], [0], [0], [1], [0, 0, 1, 1], [], []>} : vector<8x128xbf16>, vector<128x128xbf16>, vector<8x128xf32> -> vector<8x128xf32>
    %c0_9 = arith.constant 0 : index
    %c0_10 = arith.constant 0 : index
    %11 = vector.load %arg5[%c0_9, %c0_10] : memref<1x128xf32, #tpu.memory_space<vmem>>, vector<1x128xf32>
    %12 = vector.broadcast %11 : vector<1x128xf32> to vector<8x128xf32>
    %13 = arith.addf %10, %12 : vector<8x128xf32>
    %cst_11 = arith.constant 0.000000e+00 : f32
    %14 = vector.broadcast %cst_11 : f32 to vector<8x128xf32>
    %15 = arith.maximumf %13, %14 : vector<8x128xf32>
    %16 = arith.truncf %15 : vector<8x128xf32> to vector<8x128xbf16>
    %c0_12 = arith.constant 0 : index
    %c0_13 = arith.constant 0 : index
    %17 = vector.load %arg6[%c0_12, %c0_13] : memref<128x128xbf16, #tpu.memory_space<vmem>>, vector<128x128xbf16>
    %cst_14 = arith.constant dense<0.000000e+00> : vector<8x128xf32>
    %18 = tpu.matmul %16, %17, %cst_14 {dimension_numbers = #tpu.dot_dimension_numbers<[1], [0], [0], [1], [0, 0, 1, 1], [], []>} : vector<8x128xbf16>, vector<128x128xbf16>, vector<8x128xf32> -> vector<8x128xf32>
    %c0_15 = arith.constant 0 : index
    %c0_16 = arith.constant 0 : index
    %19 = vector.load %arg7[%c0_15, %c0_16] : memref<1x128xf32, #tpu.memory_space<vmem>>, vector<1x128xf32>
    %20 = vector.broadcast %19 : vector<1x128xf32> to vector<8x128xf32>
    %21 = arith.addf %18, %20 : vector<8x128xf32>
    %c0_17 = arith.constant 0 : index
    %c0_18 = arith.constant 0 : index
    %22 = vector.load %arg8[%c0_17, %c0_18] : memref<8x128xf32, #tpu.memory_space<vmem>>, vector<8x128xf32>
    tpu.vector_store %arg8[%c0_17, %c0_18], %21 {strides = array<i32>} : memref<8x128xf32, #tpu.memory_space<vmem>>, vector<8x128xf32>,
    return
  }
  func.func @transform_0(%arg0: i32) -> (i32, i32) {
    %c0_i32 = arith.constant 0 : i32
    %c0_i32_0 = arith.constant 0 : i32
    return %arg0, %c0_i32 : i32, i32
  }
  func.func @transform_1(%arg0: i32) -> (i32, i32) {
    %c0_i32 = arith.constant 0 : i32
    %c0_i32_0 = arith.constant 0 : i32
    %c0_i32_1 = arith.constant 0 : i32
    return %c0_i32, %c0_i32_0 : i32, i32
  }
  func.func @transform_2(%arg0: i32) -> (i32, i32) {
    %c0_i32 = arith.constant 0 : i32
    %c0_i32_0 = arith.constant 0 : i32
    %c0_i32_1 = arith.constant 0 : i32
    return %c0_i32, %c0_i32_0 : i32, i32
  }
  func.func @transform_3(%arg0: i32) -> (i32, i32) {
    %c0_i32 = arith.constant 0 : i32
    %c0_i32_0 = arith.constant 0 : i32
    %c0_i32_1 = arith.constant 0 : i32
    return %c0_i32, %c0_i32_0 : i32, i32
  }
  func.func @transform_4(%arg0: i32) -> (i32, i32) {
    %c0_i32 = arith.constant 0 : i32
    %c0_i32_0 = arith.constant 0 : i32
    %c0_i32_1 = arith.constant 0 : i32
    return %c0_i32, %c0_i32_0 : i32, i32
  }
  func.func @transform_5(%arg0: i32) -> (i32, i32) {
    %c0_i32 = arith.constant 0 : i32
    %c0_i32_0 = arith.constant 0 : i32
    %c0_i32_1 = arith.constant 0 : i32
    return %c0_i32, %c0_i32_0 : i32, i32
  }
  func.func @transform_6(%arg0: i32) -> (i32, i32) {
    %c0_i32 = arith.constant 0 : i32
    %c0_i32_0 = arith.constant 0 : i32
    %c0_i32_1 = arith.constant 0 : i32
    return %c0_i32, %c0_i32_0 : i32, i32
  }
  func.func @transform_7(%arg0: i32) -> (i32, i32) {
    %c0_i32 = arith.constant 0 : i32
    %c0_i32_0 = arith.constant 0 : i32
    return %arg0, %c0_i32 : i32, i32
  }
}

</mosaic_0001>

<llo_original>
// kernel: quixo_net_forward.1
$region0: #{quixo_net_forward.1}
  #allocation0 [shape = 'u32[]', space=smem, size = 0x4, offset = 0x4, fixed_abs, tag = 'smem constant byte address 0x4 - core index']
  #allocation1 [shape = 'u32[144,128]{1,0:T(1,128)}', space=vmem, size = 0x12000, scoped, tag = 'internal scratch']
  %s0 = inlined_call_operand.vmem [shape: bf16[8,32], index: 0, kind: input, shape index: {}]
  %s1 = inlined_call_operand.vmem [shape: bf16[32,128], index: 1, kind: input, shape index: {}]
  %s2 = inlined_call_operand.vmem [shape: f32[1,128], index: 2, kind: input, shape index: {}]
  %s3 = inlined_call_operand.vmem [shape: bf16[128,128], index: 3, kind: input, shape index: {}]
  %s4 = inlined_call_operand.vmem [shape: f32[1,128], index: 4, kind: input, shape index: {}]
  %s5 = inlined_call_operand.vmem [shape: bf16[128,128], index: 5, kind: input, shape index: {}]
  %s6 = inlined_call_operand.vmem [shape: f32[1,128], index: 6, kind: input, shape index: {}]
  %s7 = inlined_call_operand.hbm [shape: f32[8,128], index: 7, kind: output, shape index: {}]
  %s8 = sld [smem:[#allocation0]]
  $region38: #{quixo_net_forward.1} parent=0
    _
  %s10 = ssub.s32 1, %s8
  %s11 = scalar_select 0, %s10, %s8
  $region1: #{quixo_net_forward.1} parent=0
    #allocation2 [shape = 'u8[4096]{0}', space=vmem, size = 0x1000, scoped, tag = 'output window, operand 0, single buffered']
    #allocation3 [shape = 's32[1]{0}', space=sflag, size = 0x4, scoped, tag = 'scoped memory for quixo_net_forward.1']
    %12 = vsyncpa [#allocation3], 0
    // Predicated region
    $region2: #{quixo_net_forward.1} parent=1 // pred_check
      _
    $region3: #{quixo_net_forward.1} parent=1 // pred_check_branch
      %14 = sbr.rel (0) target = $region5
    $region4: #{quixo_net_forward.1} parent=1 // pred_region
      _
    $region5: #{quixo_net_forward.1} parent=1 // pred_fallthru
      _
    // Predicated region
    $region6: #{quixo_net_forward.1} parent=1 // pred_check
      _
    $region7: #{quixo_net_forward.1} parent=1 // pred_check_branch
      %16 = sbr.rel (0) target = $region9
    $region8: #{quixo_net_forward.1} parent=1 // pred_region
      _
    $region9: #{quixo_net_forward.1} parent=1 // pred_fallthru
      _
    // Predicated region
    $region10: #{quixo_net_forward.1} parent=1 // pred_check
      _
    $region11: #{quixo_net_forward.1} parent=1 // pred_check_branch
      %18 = sbr.rel (0) target = $region13
    $region12: #{quixo_net_forward.1} parent=1 // pred_region
      _
    $region13: #{quixo_net_forward.1} parent=1 // pred_fallthru
      _
    // Predicated region
    $region14: #{quixo_net_forward.1} parent=1 // pred_check
      _
    $region15: #{quixo_net_forward.1} parent=1 // pred_check_branch
      %20 = sbr.rel (0) target = $region17
    $region16: #{quixo_net_forward.1} parent=1 // pred_region
      _
    $region17: #{quixo_net_forward.1} parent=1 // pred_fallthru
      _
    // Predicated region
    $region18: #{quixo_net_forward.1} parent=1 // pred_check
      _
    $region19: #{quixo_net_forward.1} parent=1 // pred_check_branch
      %22 = sbr.rel (0) target = $region21
    $region20: #{quixo_net_forward.1} parent=1 // pred_region
      _
    $region21: #{quixo_net_forward.1} parent=1 // pred_fallthru
      _
    // Predicated region
    $region22: #{quixo_net_forward.1} parent=1 // pred_check
      _
    $region23: #{quixo_net_forward.1} parent=1 // pred_check_branch
      %24 = sbr.rel (0) target = $region25
    $region24: #{quixo_net_forward.1} parent=1 // pred_region
      _
    $region25: #{quixo_net_forward.1} parent=1 // pred_fallthru
      _
    // Predicated region
    $region26: #{quixo_net_forward.1} parent=1 // pred_check
      _
    $region27: #{quixo_net_forward.1} parent=1 // pred_check_branch
      %26 = sbr.rel (0) target = $region29
    $region28: #{quixo_net_forward.1} parent=1 // pred_region
      _
    $region29: #{quixo_net_forward.1} parent=1 // pred_fallthru
      _
    %v28 = vld [vmem:[%s0] sm:$0xf]
    %v29 = vld [vmem:[%s1] sm:$0xf]
    %v30 = vld [vmem:[%s1 + $0x4] sm:$0xf]
    %v31 = vld [vmem:[%s1 + $0x8] sm:$0xf]
    %v32 = vld [vmem:[%s1 + $0xc] sm:$0xf]
    %v33 = vld [vmem:[%s2] sm:$0x1]
    %v35 = vlaneseq
    %v36 = vshrl.u32 %v35, 7
    %v37 = vsub.s32 0, %v36
    %v38 = vrot.slane %v33, %v37
    %v44 = vunpack.c.l.b16 %v29
    %v45 = vunpack.c.l.b16 %v30
    %v46 = vunpack.c.l.b16 %v31
    %v47 = vunpack.c.l.b16 %v32
    %v48 = vpack.c.b16 %v45, %v44
    %v49 = vpack.c.b16 %v47, %v46
    %vm52 = vcmask 261120
    %v54 = vsel %vm52, %v28, 0
    %56 = vmatprep.subr.bf16.mxu0 0
    %57 = vmatpush1.bf16.msra.mxu0 0
    %58 = vmatprep.subr.bf16.mxu0 0
    %59 = vmatpush1.bf16.msra.mxu0 0
    %60 = vmatprep.subr.bf16.mxu0 0
    %61 = vmatpush1.bf16.msra.mxu0 0
    %62 = vmatprep.subr.bf16.mxu0 0
    %63 = vmatpush1.bf16.msra.mxu0 0
    %64 = vmatprep.subr.bf16.mxu0 0
    %65 = vmatpush1.bf16.msra.mxu0 0
    %66 = vmatprep.subr.bf16.mxu0 0
    %67 = vmatpush1.bf16.msra.mxu0 0
    %68 = vmatprep.subr.bf16.mxu0 0
    %69 = vmatpush1.bf16.msra.mxu0 %v49
    %70 = vmatprep.subr.bf16.mxu0 0
    %71 = vmatpush1.bf16.msra.mxu0 %v48
    %72 = vmatprep.subr.bf16.mxu0 0
    %73 = vmatpush2.bf16.msra.mxu0 0
    %74 = vmatprep.subr.bf16.mxu0 0
    %75 = vmatpush2.bf16.msra.mxu0 0
    %76 = vmatprep.subr.bf16.mxu0 0
    %77 = vmatpush2.bf16.msra.mxu0 0
    %78 = vmatprep.subr.bf16.mxu0 0
    %79 = vmatpush2.bf16.msra.mxu0 0
    %80 = vmatprep.subr.bf16.mxu0 0
    %81 = vmatpush2.bf16.msra.mxu0 0
    %82 = vmatprep.subr.bf16.mxu0 0
    %83 = vmatpush2.bf16.msra.mxu0 0
    %84 = vmatprep.subr.bf16.mxu0 0
    %85 = vmatpush2.bf16.msra.mxu0 0
    %86 = vmatprep.subr.bf16.mxu0 0
    %87 = vmatpush2.bf16.msra.mxu0 0
    %88 = vmatprep.mubr.bf16.mxu0 0
    %89 = vmatmul.mubr.bf16.gmra.mxu0 %v54
    %v90 = vpop.f32.mrf.mxu0
    %v91 = vadd.f32 %v38, %v90
    %v92 = vpop.f32.mrf.mxu0
    %v93 = vpop.f32.mrf.mxu0
    %v94 = vpop.f32.mrf.mxu0
    %95 = vdwg.mxu0
    %v96 = vmax.f32 %v91, 0.0
    %v97 = vpack.c.bf16 %v96, %v96
    %v98 = vld [vmem:[%s3] sm:$0xf]
    %v99 = vld [vmem:[%s3 + $0x4] sm:$0xf]
    %v100 = vld [vmem:[%s3 + $0x8] sm:$0xf]
    %v101 = vld [vmem:[%s3 + $0xc] sm:$0xf]
    %v102 = vld [vmem:[%s3 + $0x10] sm:$0xf]
    %v103 = vld [vmem:[%s3 + $0x14] sm:$0xf]
    %v104 = vld [vmem:[%s3 + $0x18] sm:$0xf]
    %v105 = vld [vmem:[%s3 + $0x1c] sm:$0xf]
    %v106 = vld [vmem:[%s3 + $0x20] sm:$0xf]
    %v107 = vld [vmem:[%s3 + $0x24] sm:$0xf]
    %v108 = vld [vmem:[%s3 + $0x28] sm:$0xf]
    %v109 = vld [vmem:[%s3 + $0x2c] sm:$0xf]
    %v110 = vld [vmem:[%s3 + $0x30] sm:$0xf]
    %v111 = vld [vmem:[%s3 + $0x34] sm:$0xf]
    %v112 = vld [vmem:[%s3 + $0x38] sm:$0xf]
    %v113 = vld [vmem:[%s3 + $0x3c] sm:$0xf]
    %v114 = vld [vmem:[%s4] sm:$0x1]
    %v116 = vlaneseq
    %v117 = vshrl.u32 %v116, 7
    %v118 = vsub.s32 0, %v117
    %v119 = vrot.slane %v114, %v118
    %v137 = vunpack.c.l.b16 %v98
    %v138 = vunpack.c.l.b16 %v99
    %v139 = vunpack.c.l.b16 %v100
    %v140 = vunpack.c.l.b16 %v101
    %v141 = vunpack.c.l.b16 %v102
    %v142 = vunpack.c.l.b16 %v103
    %v143 = vunpack.c.l.b16 %v104
    %v144 = vunpack.c.l.b16 %v105
    %v145 = vunpack.c.l.b16 %v106
    %v146 = vunpack.c.l.b16 %v107
    %v147 = vunpack.c.l.b16 %v108
    %v148 = vunpack.c.l.b16 %v109
    %v149 = vunpack.c.l.b16 %v110
    %v150 = vunpack.c.l.b16 %v111
    %v151 = vunpack.c.l.b16 %v112
    %v152 = vunpack.c.l.b16 %v113
    %v153 = vpack.c.b16 %v138, %v137
    %v154 = vpack.c.b16 %v140, %v139
    %v155 = vpack.c.b16 %v142, %v141
    %v156 = vpack.c.b16 %v144, %v143
    %v157 = vpack.c.b16 %v146, %v145
    %v158 = vpack.c.b16 %v148, %v147
    %v159 = vpack.c.b16 %v150, %v149
    %v160 = vpack.c.b16 %v152, %v151
    %169 = vmatprep.subr.bf16.mxu0 0
    %170 = vmatpush1.bf16.msra.mxu0 %v160
    %171 = vmatprep.subr.bf16.mxu0 0
    %172 = vmatpush1.bf16.msra.mxu0 %v159
    %173 = vmatprep.subr.bf16.mxu0 0
    %174 = vmatpush1.bf16.msra.mxu0 %v158
    %175 = vmatprep.subr.bf16.mxu0 0
    %176 = vmatpush1.bf16.msra.mxu0 %v157
    %177 = vmatprep.subr.bf16.mxu0 0
    %178 = vmatpush1.bf16.msra.mxu0 %v156
    %179 = vmatprep.subr.bf16.mxu0 0
    %180 = vmatpush1.bf16.msra.mxu0 %v155
    %181 = vmatprep.subr.bf16.mxu0 0
    %182 = vmatpush1.bf16.msra.mxu0 %v154
    %183 = vmatprep.subr.bf16.mxu0 0
    %184 = vmatpush1.bf16.msra.mxu0 %v153
    %185 = vmatprep.subr.bf16.mxu0 0
    %186 = vmatpush2.bf16.msra.mxu0 0
    %187 = vmatprep.subr.bf16.mxu0 0
    %188 = vmatpush2.bf16.msra.mxu0 0
    %189 = vmatprep.subr.bf16.mxu0 0
    %190 = vmatpush2.bf16.msra.mxu0 0
    %191 = vmatprep.subr.bf16.mxu0 0
    %192 = vmatpush2.bf16.msra.mxu0 0
    %193 = vmatprep.subr.bf16.mxu0 0
    %194 = vmatpush2.bf16.msra.mxu0 0
    %195 = vmatprep.subr.bf16.mxu0 0
    %196 = vmatpush2.bf16.msra.mxu0 0
    %197 = vmatprep.subr.bf16.mxu0 0
    %198 = vmatpush2.bf16.msra.mxu0 0
    %199 = vmatprep.subr.bf16.mxu0 0
    %200 = vmatpush2.bf16.msra.mxu0 0
    %201 = vmatprep.mubr.bf16.mxu0 0
    %202 = vmatmul.mubr.bf16.gmra.mxu0 %v97
    %v203 = vpop.f32.mrf.mxu0
    %v204 = vadd.f32 %v119, %v203
    %v205 = vpop.f32.mrf.mxu0
    %v206 = vpop.f32.mrf.mxu0
    %v207 = vpop.f32.mrf.mxu0
    %208 = vdwg.mxu0
    %v209 = vmax.f32 %v204, 0.0
    %v210 = vpack.c.bf16 %v209, %v209
    %v211 = vld [vmem:[%s5] sm:$0xf]
    %v212 = vld [vmem:[%s5 + $0x4] sm:$0xf]
    %v213 = vld [vmem:[%s5 + $0x8] sm:$0xf]
    %v214 = vld [vmem:[%s5 + $0xc] sm:$0xf]
    %v215 = vld [vmem:[%s5 + $0x10] sm:$0xf]
    %v216 = vld [vmem:[%s5 + $0x14] sm:$0xf]
    %v217 = vld [vmem:[%s5 + $0x18] sm:$0xf]
    %v218 = vld [vmem:[%s5 + $0x1c] sm:$0xf]
    %v219 = vld [vmem:[%s5 + $0x20] sm:$0xf]
    %v220 = vld [vmem:[%s5 + $0x24] sm:$0xf]
    %v221 = vld [vmem:[%s5 + $0x28] sm:$0xf]
    %v222 = vld [vmem:[%s5 + $0x2c] sm:$0xf]
    %v223 = vld [vmem:[%s5 + $0x30] sm:$0xf]
    %v224 = vld [vmem:[%s5 + $0x34] sm:$0xf]
    %v225 = vld [vmem:[%s5 + $0x38] sm:$0xf]
    %v226 = vld [vmem:[%s5 + $0x3c] sm:$0xf]
    %v227 = vld [vmem:[%s6] sm:$0x1]
    %v229 = vlaneseq
    %v230 = vshrl.u32 %v229, 7
    %v231 = vsub.s32 0, %v230
    %v232 = vrot.slane %v227, %v231
    %v250 = vunpack.c.l.b16 %v211
    %v251 = vunpack.c.l.b16 %v212
    %v252 = vunpack.c.l.b16 %v213
    %v253 = vunpack.c.l.b16 %v214
    %v254 = vunpack.c.l.b16 %v215
    %v255 = vunpack.c.l.b16 %v216
    %v256 = vunpack.c.l.b16 %v217
    %v257 = vunpack.c.l.b16 %v218
    %v258 = vunpack.c.l.b16 %v219
    %v259 = vunpack.c.l.b16 %v220
    %v260 = vunpack.c.l.b16 %v221
    %v261 = vunpack.c.l.b16 %v222
    %v262 = vunpack.c.l.b16 %v223
    %v263 = vunpack.c.l.b16 %v224
    %v264 = vunpack.c.l.b16 %v225
    %v265 = vunpack.c.l.b16 %v226
    %v266 = vpack.c.b16 %v251, %v250
    %v267 = vpack.c.b16 %v253, %v252
    %v268 = vpack.c.b16 %v255, %v254
    %v269 = vpack.c.b16 %v257, %v256
    %v270 = vpack.c.b16 %v259, %v258
    %v271 = vpack.c.b16 %v261, %v260
    %v272 = vpack.c.b16 %v263, %v262
    %v273 = vpack.c.b16 %v265, %v264
    %282 = vmatprep.subr.bf16.mxu0 0
    %283 = vmatpush1.bf16.msra.mxu0 %v273
    %284 = vmatprep.subr.bf16.mxu0 0
    %285 = vmatpush1.bf16.msra.mxu0 %v272
    %286 = vmatprep.subr.bf16.mxu0 0
    %287 = vmatpush1.bf16.msra.mxu0 %v271
    %288 = vmatprep.subr.bf16.mxu0 0
    %289 = vmatpush1.bf16.msra.mxu0 %v270
    %290 = vmatprep.subr.bf16.mxu0 0
    %291 = vmatpush1.bf16.msra.mxu0 %v269
    %292 = vmatprep.subr.bf16.mxu0 0
    %293 = vmatpush1.bf16.msra.mxu0 %v268
    %294 = vmatprep.subr.bf16.mxu0 0
    %295 = vmatpush1.bf16.msra.mxu0 %v267
    %296 = vmatprep.subr.bf16.mxu0 0
    %297 = vmatpush1.bf16.msra.mxu0 %v266
    %298 = vmatprep.subr.bf16.mxu0 0
    %299 = vmatpush2.bf16.msra.mxu0 0
    %300 = vmatprep.subr.bf16.mxu0 0
    %301 = vmatpush2.bf16.msra.mxu0 0
    %302 = vmatprep.subr.bf16.mxu0 0
    %303 = vmatpush2.bf16.msra.mxu0 0
    %304 = vmatprep.subr.bf16.mxu0 0
    %305 = vmatpush2.bf16.msra.mxu0 0
    %306 = vmatprep.subr.bf16.mxu0 0
    %307 = vmatpush2.bf16.msra.mxu0 0
    %308 = vmatprep.subr.bf16.mxu0 0
    %309 = vmatpush2.bf16.msra.mxu0 0
    %310 = vmatprep.subr.bf16.mxu0 0
    %311 = vmatpush2.bf16.msra.mxu0 0
    %312 = vmatprep.subr.bf16.mxu0 0
    %313 = vmatpush2.bf16.msra.mxu0 0
    %314 = vmatprep.mubr.bf16.mxu0 0
    %315 = vmatmul.mubr.bf16.gmra.mxu0 %v210
    %v316 = vpop.f32.mrf.mxu0
    %v317 = vadd.f32 %v232, %v316
    %v318 = vpop.f32.mrf.mxu0
    %v319 = vpop.f32.mrf.mxu0
    %v320 = vpop.f32.mrf.mxu0
    %321 = vdwg.mxu0
    %322 = vst [vmem:[#allocation2] sm:$0xff] %v317
    // Predicated region
    $region30: #{quixo_net_forward.1} parent=1 // pred_check
      _
    $region31: #{quixo_net_forward.1} parent=1 // pred_check_branch
      %324 = sbr.rel (0) target = $region33
    $region32: #{quixo_net_forward.1} parent=1 // pred_region
      %s326 = ssub.s32 128, 128
      %327 = vsyncadd [#allocation3], %s326
      %s329 = sshll.u32 [#allocation2], 4
      %s330 = int_to_ptr.vmem [resolvable:$true] %s329
      %332 = dma.vmem_to_hbm [thread:$0]  %s330, 128, %s7, [#allocation3]
    $region33: #{quixo_net_forward.1} parent=1 // pred_fallthru
      _
    // Predicated region
    $region34: #{quixo_net_forward.1} parent=1 // pred_check
      _
    $region35: #{quixo_net_forward.1} parent=1 // pred_check_branch
      %334 = sbr.rel (0) target = $region37
    $region36: #{quixo_net_forward.1} parent=1 // pred_region
      %335 = dma.done [#allocation3], 128
    $region37: #{quixo_net_forward.1} parent=1 // pred_fallthru
      _
    %336 = vsyncpa [#allocation3], 1

</llo_original>
